<compile_context>
chip_gen: v5e
topology: v5e:2x2
jax: 0.10.0
libtpu: 0.0.40
codegen_flags: <defaults>
</compile_context>

<pallas_src>
import functools

import jax
import jax.numpy as jnp
from jax.experimental import pallas as pl
from jax.experimental.pallas import tpu as pltpu


# Per-grid-step working-set budget (inputs + outputs + tables for one step).
# ~12 MiB is a good compromise: v6e wants 14-16 MiB, v7x 10-12 MiB (64 MiB VMEM
# per core), v5e anything <= ~16 MiB once the scoped limit is raised.
_STEP_BUDGET_BYTES = 12 << 20
# Explicit scoped-VMEM limit: 2x budget (double buffering) + headroom; safe on
# v5e/v6e (128 MiB physical) and v7x (64 MiB physical per TensorCore).
_VMEM_LIMIT_BYTES = 32 << 20


# ---------------------------------------------------------------------------
# pltpu.roll availability probe (one tiny kernel, cached)
# ---------------------------------------------------------------------------
_ROLL_SUPPORTED = None


def _roll_supported():
    """pltpu.roll (XLU rotate) is the cheapest rotate-half on real TPUs, but it
    is not supported under every interpret/emulation configuration.  Probe once
    with a tiny kernel; fall back to slice+concat if it fails (hidden under DMA
    on this bandwidth-bound kernel either way)."""
    global _ROLL_SUPPORTED
    if _ROLL_SUPPORTED is None:
        def _probe(x_ref, o_ref):
            o_ref[...] = pltpu.roll(x_ref[...], shift=64, axis=1)

        try:
            x = jnp.zeros((8, 128), jnp.float32)
            jax.block_until_ready(
                pl.pallas_call(
                    _probe,
                    out_shape=jax.ShapeDtypeStruct((8, 128), jnp.float32),
                )(x))
            _ROLL_SUPPORTED = True
        except Exception:
            _ROLL_SUPPORTED = False
    return _ROLL_SUPPORTED


# ---------------------------------------------------------------------------
# Kernels
# ---------------------------------------------------------------------------
def _rope_math(x, cos, sin_signed, out_dtype, use_roll):
    """x: (Bb, H, St, D); cos / sin_signed: (Bc, St, D), sign folded into sin.

    swap(x) == concat(x2, x1) and sin_signed == concat(-sin_f, sin_f), so
    swap(x) * sin_signed == concat(-x2, x1) * sin == rotate_half(x) * sin.
    Tables are f32; the multiply promotes and only the output is cast back.
    """
    half = x.shape[-1] // 2
    if use_roll:
        # Positive axis: Mosaic's roll rejects negative axes.  Shift by D/2 in
        # either direction is the same swap, so roll direction is irrelevant.
        x_swap = pltpu.roll(x, shift=half, axis=x.ndim - 1)
    else:
        x_swap = jnp.concatenate([x[..., half:], x[..., :half]], axis=-1)
    cos_b = cos[:, None, :, :]            # (Bc, 1, St, D) broadcasts over heads
    sin_b = sin_signed[:, None, :, :]     # (and over batch when Bc == 1)
    return (x * cos_b + x_swap * sin_b).astype(out_dtype)


def _rope_qk_kernel(q_ref, k_ref, cos_ref, sin_ref, qo_ref, ko_ref, *, use_roll):
    cos = cos_ref[...]          # (Bc, St, D) f32
    sin = sin_ref[...]          # (Bc, St, D) f32, first half pre-negated
    qo_ref[...] = _rope_math(q_ref[...], cos, sin, qo_ref.dtype, use_roll)
    ko_ref[...] = _rope_math(k_ref[...], cos, sin, ko_ref.dtype, use_roll)


def _rope_q_kernel(q_ref, cos_ref, sin_ref, qo_ref, *, use_roll):
    qo_ref[...] = _rope_math(q_ref[...], cos_ref[...], sin_ref[...],
                             qo_ref.dtype, use_roll)


# ---------------------------------------------------------------------------
# Tiling helpers + pallas_call wrapper
# ---------------------------------------------------------------------------
def _choose_s_tile(S, bytes_per_row, sub, budget_bytes):
    """Largest S-tile whose per-step working set stays under budget_bytes.

    `sub` is the dtype-native sublane packing (8 for f32, 16 for bf16, 32 for
    8-bit).  Prefers a divisor of S so the trailing grid step isn't a ragged
    padded tile.
    """
    s_tile = max(1, budget_bytes // max(1, bytes_per_row))
    if s_tile >= S:
        return S                                  # whole seq axis in one block
    s_tile = max(sub, (s_tile // sub) * sub)      # respect (8,128) + packing
    if S % s_tile:
        for cand in range(s_tile, sub - 1, -sub):
            if S % cand == 0:
                return cand
    return s_tile


def apply_rope_pallas(q, k, cos_sel, sin_signed_sel, *,
                      budget_bytes=_STEP_BUDGET_BYTES,
                      vmem_limit_bytes=_VMEM_LIMIT_BYTES):
    """q: (B, Hq, S, D); k: (B, Hk, S, D) or None; tables: (Bc, S, D) f32,
    Bc in {1, B}."""
    B, Hq, S, D = q.shape
    Bc = cos_sel.shape[0]
    assert Bc in (1, B), "cos/sin batch dim must be 1 or B"
    Hk = 0 if k is None else k.shape[1]
    if k is not None:
        assert k.shape[0] == B and k.shape[2] == S and k.shape[3] == D

    itemsize = q.dtype.itemsize
    tbl_itemsize = cos_sel.dtype.itemsize
    sub = max(8, 32 // itemsize)                  # sublane packing multiple
    use_roll = _roll_supported()

    # Bytes through VMEM per (batch element, seq position): q in+out, k in+out,
    # cos, sin.
    bytes_per_row = (2 * Hq + 2 * Hk) * D * itemsize + 2 * D * tbl_itemsize
    total_bytes = B * S * bytes_per_row

    if total_bytes <= budget_bytes:
        # Small problem (decode / tests): fold batch into the block -> 1 step,
        # amortizing all per-step overhead and fetching the tables exactly once.
        grid = (1,)
        q_spec = pl.BlockSpec((B, Hq, S, D), lambda s: (0, 0, 0, 0))
        k_spec = None if k is None else pl.BlockSpec((B, Hk, S, D),
                                                     lambda s: (0, 0, 0, 0))
        cs_spec = pl.BlockSpec((Bc, S, D), lambda s: (0, 0, 0))
        dim_sem = ("arbitrary",)
    else:
        s_tile = _choose_s_tile(S, bytes_per_row, sub, budget_bytes)
        n_s = pl.cdiv(S, s_tile)
        # Keep enough total steps for v7x's two TensorCores (megacore sharding).
        if B * n_s < 4 and S > sub:
            want_tiles = -(-4 // B)
            cand = (pl.cdiv(S, want_tiles) // sub) * sub
            if sub <= cand < s_tile:
                s_tile = cand
                n_s = pl.cdiv(S, s_tile)
        # Batch innermost: when Bc == 1 the table block index is constant
        # across the inner axis, so Pallas does not re-DMA cos/sin per batch.
        grid = (n_s, B)
        q_spec = pl.BlockSpec((1, Hq, s_tile, D), lambda s, b: (b, 0, s, 0))
        k_spec = None if k is None else pl.BlockSpec((1, Hk, s_tile, D),
                                                     lambda s, b: (b, 0, s, 0))
        if Bc == B:
            cs_spec = pl.BlockSpec((1, s_tile, D), lambda s, b: (b, s, 0))
        else:
            cs_spec = pl.BlockSpec((1, s_tile, D), lambda s, b: (0, s, 0))
        dim_sem = ("parallel", "parallel")

    compiler_params = pltpu.CompilerParams(
        dimension_semantics=dim_sem,
        vmem_limit_bytes=vmem_limit_bytes)

    if k is None:
        kernel = functools.partial(_rope_q_kernel, use_roll=use_roll)
        return pl.pallas_call(
            kernel,
            out_shape=jax.ShapeDtypeStruct(q.shape, q.dtype),
            grid=grid,
            in_specs=[q_spec, cs_spec, cs_spec],
            out_specs=q_spec,
            compiler_params=compiler_params,
        )(q, cos_sel, sin_signed_sel)

    kernel = functools.partial(_rope_qk_kernel, use_roll=use_roll)
    return pl.pallas_call(
        kernel,
        out_shape=(jax.ShapeDtypeStruct(q.shape, q.dtype),
                   jax.ShapeDtypeStruct(k.shape, k.dtype)),
        grid=grid,
        in_specs=[q_spec, k_spec, cs_spec, cs_spec],
        out_specs=(q_spec, k_spec),
        compiler_params=compiler_params,
    )(q, k, cos_sel, sin_signed_sel)


# ---------------------------------------------------------------------------
# Module
# ---------------------------------------------------------------------------
class RotaryEmbedding:
    """JAX/Pallas port of fuxictr RotaryEmbedding."""

    def __init__(self, dim, max_position_embeddings=2048, base=10000):
        self.dim = dim
        self.max_position_embeddings = max_position_embeddings
        self.base = base
        self.inv_freq = 1.0 / (base ** (
            jnp.arange(0, dim, 2, dtype=jnp.float32) / dim))
        self._set_cos_sin_cache(max_position_embeddings)

    def _set_cos_sin_cache(self, seq_len):
        self.max_seq_len_cached = seq_len
        t = jnp.arange(seq_len, dtype=jnp.float32)
        freqs = jnp.einsum('i,j->ij', t, self.inv_freq)
        emb = jnp.concatenate([freqs, freqs], axis=-1)        # (seq_len, dim)
        self.cos_cached = jnp.cos(emb)                         # f32, kept in f32
        self.sin_cached = jnp.sin(emb)
        # Sign folded once at cache-build time so the kernel uses a single
        # roll/swap with no negate.  Relies on emb = concat(freqs, freqs), i.e.
        # sin[:half] == sin[half:] (true for this cache construction).
        half = self.dim // 2
        sign = jnp.concatenate([-jnp.ones((half,), jnp.float32),
                                jnp.ones((half,), jnp.float32)])
        self.sin_signed_cached = self.sin_cached * sign

    def __call__(self, query_states, key_states=None, seq_len=None,
                 position_ids=None):
        B, H, S, D = query_states.shape
        assert D == self.dim and D % 2 == 0, "head_dim must equal dim and be even"
        seq_len = S if seq_len is None else seq_len   # explicit 0 is respected
        if seq_len > self.max_seq_len_cached:
            self._set_cos_sin_cache(seq_len)
        if position_ids is None:
            # Default arange positions: a cheap slice of the cached table, no
            # per-call gather/cast pass over 2*S*D elements.
            cos_sel = self.cos_cached[:S][None]                # (1, S, D) f32
            sin_sel = self.sin_signed_cached[:S][None]
        else:
            if position_ids.ndim == 1:
                position_ids = position_ids[None, :]
            cos_sel = self.cos_cached[position_ids]            # (Bp, S, D) f32
            sin_sel = self.sin_signed_cached[position_ids]
        assert cos_sel.shape[-2] == S, "position_ids / seq_len must match seq axis"
        # Tables stay f32 (more accurate, free on v5e which has no bf16 VALU);
        # the kernel casts only the output back to the activation dtype.
        return apply_rope_pallas(query_states, key_states, cos_sel, sin_sel)


# ---------------------------------------------------------------------------
# Pure-JAX reference + test
# ---------------------------------------------------------------------------
def _rope_ref(x, cos_sel, sin_sel):
    half = x.shape[-1] // 2
    x_rot = jnp.concatenate([-x[..., half:], x[..., :half]], axis=-1)
    c = cos_sel[:, None, :, :]
    s = sin_sel[:, None, :, :]
    return x * c + x_rot * s


if __name__ == "__main__":
    B, H, S, D = 2, 4, 16, 128   # small shapes; D=128 keeps blocks lane-dense
    key = jax.random.PRNGKey(0)
    kq, kk = jax.random.split(key)
    q = jax.random.normal(kq, (B, H, S, D), dtype=jnp.float32)
    k = jax.random.normal(kk, (B, H, S, D), dtype=jnp.float32)

    rope = RotaryEmbedding(dim=D, max_position_embeddings=64)

    # Fused Q+K path (small problem -> single-step, batch-folded block).
    q_embed, k_embed = rope(q, k)
    q_embed = jax.block_until_ready(q_embed)
    k_embed = jax.block_until_ready(k_embed)

    # Validate against the pure-JAX reference (unsigned sin, concat rotate_half).
    pos = jnp.arange(S)[None, :]
    cos_sel = rope.cos_cached[pos]        # (1, S, D)
    sin_sel = rope.sin_cached[pos]        # (1, S, D)
    q_ref = _rope_ref(q, cos_sel, sin_sel)
    k_ref = _rope_ref(k, cos_sel, sin_sel)
    assert jnp.allclose(q_embed, q_ref, atol=1e-5, rtol=1e-5)
    assert jnp.allclose(k_embed, k_ref, atol=1e-5, rtol=1e-5)

    # key_states=None path.
    q_only = jax.block_until_ready(rope(q))
    assert jnp.allclose(q_only, q_ref, atol=1e-5, rtol=1e-5)

    # Explicit position_ids (gather path).
    pos_rev = jnp.arange(S - 1, -1, -1, dtype=jnp.int32)[None, :]
    q_rev, k_rev = rope(q, k, position_ids=pos_rev)
    q_rev = jax.block_until_ready(q_rev)
    q_rev_ref = _rope_ref(q, rope.cos_cached[pos_rev], rope.sin_cached[pos_rev])
    assert jnp.allclose(q_rev, q_rev_ref, atol=1e-5, rtol=1e-5)

    # Force the tiled (S_tiles, B) grid path with a tiny per-step budget to
    # exercise the large-problem tiling code on these small shapes.
    cos_f = rope.cos_cached[:S][None]
    sin_f = rope.sin_signed_cached[:S][None]
    q_t, k_t = apply_rope_pallas(q, k, cos_f, sin_f, budget_bytes=32 * 1024)
    q_t = jax.block_until_ready(q_t)
    k_t = jax.block_until_ready(k_t)
    assert jnp.allclose(q_t, q_ref, atol=1e-5, rtol=1e-5)
    assert jnp.allclose(k_t, k_ref, atol=1e-5, rtol=1e-5)

    print("KERNEL_OK")
</pallas_src>

<mosaic_0001>
module attributes {stable_mosaic.version = 11 : i64} {
  func.func @_probe(%arg0: memref<8x128xf32, #tpu.memory_space<vmem>>, %arg1: memref<8x128xf32, #tpu.memory_space<vmem>>) attributes {dimension_semantics = [], scalar_prefetch = 0 : i64, scratch_operands = 0 : i64, tpu.core_type = #tpu.core_type<tc>} {
    %c0 = arith.constant 0 : index
    %c0_0 = arith.constant 0 : index
    %0 = vector.load %arg0[%c0, %c0_0] : memref<8x128xf32, #tpu.memory_space<vmem>>, vector<8x128xf32>
    %c64_i32 = arith.constant 64 : i32
    %1 = tpu.dynamic_rotate %0 by %c64_i32 dim 1 : vector<8x128xf32>, i32 -> vector<8x128xf32>
    %c0_1 = arith.constant 0 : index
    %c0_2 = arith.constant 0 : index
    %2 = vector.load %arg1[%c0_1, %c0_2] : memref<8x128xf32, #tpu.memory_space<vmem>>, vector<8x128xf32>
    tpu.vector_store %arg1[%c0_1, %c0_2], %1 {strides = array<i32>} : memref<8x128xf32, #tpu.memory_space<vmem>>, vector<8x128xf32>,
    return
  }
}

module attributes {stable_mosaic.version = 11 : i64} {
  func.func @_rope_qk_kernel(%arg0: i32, %arg1: memref<2x4x16x128xf32, #tpu.memory_space<vmem>>, %arg2: memref<2x4x16x128xf32, #tpu.memory_space<vmem>>, %arg3: memref<1x16x128xf32, #tpu.memory_space<vmem>>, %arg4: memref<1x16x128xf32, #tpu.memory_space<vmem>>, %arg5: memref<2x4x16x128xf32, #tpu.memory_space<vmem>>, %arg6: memref<2x4x16x128xf32, #tpu.memory_space<vmem>>) attributes {dimension_semantics = [#tpu.dimension_semantics<arbitrary>], iteration_bounds = array<i64: 1>, scalar_prefetch = 0 : i64, scratch_operands = 0 : i64, tpu.core_type = #tpu.core_type<tc>, window_params = [{pipeline_mode = #tpu.pipeline_mode<synchronous>, transform_indices = @transform_0, window_bounds = array<i64: 2, 4, 16, 128>}, {pipeline_mode = #tpu.pipeline_mode<synchronous>, transform_indices = @transform_1, window_bounds = array<i64: 2, 4, 16, 128>}, {pipeline_mode = #tpu.pipeline_mode<synchronous>, transform_indices = @transform_2, window_bounds = array<i64: 1, 16, 128>}, {pipeline_mode = #tpu.pipeline_mode<synchronous>, transform_indices = @transform_3, window_bounds = array<i64: 1, 16, 128>}, {pipeline_mode = #tpu.pipeline_mode<synchronous>, transform_indices = @transform_4, window_bounds = array<i64: 2, 4, 16, 128>}, {pipeline_mode = #tpu.pipeline_mode<synchronous>, transform_indices = @transform_5, window_bounds = array<i64: 2, 4, 16, 128>}]} {
    %c0 = arith.constant 0 : index
    %c0_0 = arith.constant 0 : index
    %c0_1 = arith.constant 0 : index
    %0 = vector.load %arg3[%c0, %c0_0, %c0_1] : memref<1x16x128xf32, #tpu.memory_space<vmem>>, vector<1x16x128xf32>
    %c0_2 = arith.constant 0 : index
    %c0_3 = arith.constant 0 : index
    %c0_4 = arith.constant 0 : index
    %1 = vector.load %arg4[%c0_2, %c0_3, %c0_4] : memref<1x16x128xf32, #tpu.memory_space<vmem>>, vector<1x16x128xf32>
    %c0_5 = arith.constant 0 : index
    %c0_6 = arith.constant 0 : index
    %c0_7 = arith.constant 0 : index
    %c0_8 = arith.constant 0 : index
    %2 = vector.load %arg1[%c0_5, %c0_6, %c0_7, %c0_8] : memref<2x4x16x128xf32, #tpu.memory_space<vmem>>, vector<2x4x16x128xf32>
    %3 = vector.extract_strided_slice %2 {offsets = [0, 0, 0, 64], sizes = [2, 4, 16, 64], strides = [1, 1, 1, 1]} : vector<2x4x16x128xf32> to vector<2x4x16x64xf32>
    %4 = vector.extract_strided_slice %2 {offsets = [0, 0, 0, 0], sizes = [2, 4, 16, 64], strides = [1, 1, 1, 1]} : vector<2x4x16x128xf32> to vector<2x4x16x64xf32>
    %5 = tpu.concatenate %3, %4 in 3 : vector<2x4x16x64xf32>, vector<2x4x16x64xf32> -> vector<2x4x16x128xf32>
    %6 = vector.shape_cast %0 : vector<1x16x128xf32> to vector<1x1x16x128xf32>
    %7 = vector.shape_cast %1 : vector<1x16x128xf32> to vector<1x1x16x128xf32>
    %8 = vector.broadcast %6 : vector<1x1x16x128xf32> to vector<2x4x16x128xf32>
    %9 = arith.mulf %2, %8 : vector<2x4x16x128xf32>
    %10 = vector.broadcast %7 : vector<1x1x16x128xf32> to vector<2x4x16x128xf32>
    %11 = arith.mulf %5, %10 : vector<2x4x16x128xf32>
    %12 = arith.addf %9, %11 : vector<2x4x16x128xf32>
    %c0_9 = arith.constant 0 : index
    %c0_10 = arith.constant 0 : index
    %c0_11 = arith.constant 0 : index
    %c0_12 = arith.constant 0 : index
    %13 = vector.load %arg5[%c0_9, %c0_10, %c0_11, %c0_12] : memref<2x4x16x128xf32, #tpu.memory_space<vmem>>, vector<2x4x16x128xf32>
    tpu.vector_store %arg5[%c0_9, %c0_10, %c0_11, %c0_12], %12 {strides = array<i32>} : memref<2x4x16x128xf32, #tpu.memory_space<vmem>>, vector<2x4x16x128xf32>,
    %c0_13 = arith.constant 0 : index
    %c0_14 = arith.constant 0 : index
    %c0_15 = arith.constant 0 : index
    %c0_16 = arith.constant 0 : index
    %14 = vector.load %arg2[%c0_13, %c0_14, %c0_15, %c0_16] : memref<2x4x16x128xf32, #tpu.memory_space<vmem>>, vector<2x4x16x128xf32>
    %15 = vector.extract_strided_slice %14 {offsets = [0, 0, 0, 64], sizes = [2, 4, 16, 64], strides = [1, 1, 1, 1]} : vector<2x4x16x128xf32> to vector<2x4x16x64xf32>
    %16 = vector.extract_strided_slice %14 {offsets = [0, 0, 0, 0], sizes = [2, 4, 16, 64], strides = [1, 1, 1, 1]} : vector<2x4x16x128xf32> to vector<2x4x16x64xf32>
    %17 = tpu.concatenate %15, %16 in 3 : vector<2x4x16x64xf32>, vector<2x4x16x64xf32> -> vector<2x4x16x128xf32>
    %18 = vector.shape_cast %0 : vector<1x16x128xf32> to vector<1x1x16x128xf32>
    %19 = vector.shape_cast %1 : vector<1x16x128xf32> to vector<1x1x16x128xf32>
    %20 = vector.broadcast %18 : vector<1x1x16x128xf32> to vector<2x4x16x128xf32>
    %21 = arith.mulf %14, %20 : vector<2x4x16x128xf32>
    %22 = vector.broadcast %19 : vector<1x1x16x128xf32> to vector<2x4x16x128xf32>
    %23 = arith.mulf %17, %22 : vector<2x4x16x128xf32>
    %24 = arith.addf %21, %23 : vector<2x4x16x128xf32>
    %c0_17 = arith.constant 0 : index
    %c0_18 = arith.constant 0 : index
    %c0_19 = arith.constant 0 : index
    %c0_20 = arith.constant 0 : index
    %25 = vector.load %arg6[%c0_17, %c0_18, %c0_19, %c0_20] : memref<2x4x16x128xf32, #tpu.memory_space<vmem>>, vector<2x4x16x128xf32>
    tpu.vector_store %arg6[%c0_17, %c0_18, %c0_19, %c0_20], %24 {strides = array<i32>} : memref<2x4x16x128xf32, #tpu.memory_space<vmem>>, vector<2x4x16x128xf32>,
    return
  }
  func.func @transform_0(%arg0: i32) -> (i32, i32, i32, i32) {
    %c0_i32 = arith.constant 0 : i32
    %c0_i32_0 = arith.constant 0 : i32
    %c0_i32_1 = arith.constant 0 : i32
    %c0_i32_2 = arith.constant 0 : i32
    %c0_i32_3 = arith.constant 0 : i32
    return %c0_i32, %c0_i32_0, %c0_i32_1, %c0_i32_2 : i32, i32, i32, i32
  }
  func.func @transform_1(%arg0: i32) -> (i32, i32, i32, i32) {
    %c0_i32 = arith.constant 0 : i32
    %c0_i32_0 = arith.constant 0 : i32
    %c0_i32_1 = arith.constant 0 : i32
    %c0_i32_2 = arith.constant 0 : i32
    %c0_i32_3 = arith.constant 0 : i32
    return %c0_i32, %c0_i32_0, %c0_i32_1, %c0_i32_2 : i32, i32, i32, i32
  }
  func.func @transform_2(%arg0: i32) -> (i32, i32, i32) {
    %c0_i32 = arith.constant 0 : i32
    %c0_i32_0 = arith.constant 0 : i32
    %c0_i32_1 = arith.constant 0 : i32
    %c0_i32_2 = arith.constant 0 : i32
    return %c0_i32, %c0_i32_0, %c0_i32_1 : i32, i32, i32
  }
  func.func @transform_3(%arg0: i32) -> (i32, i32, i32) {
    %c0_i32 = arith.constant 0 : i32
    %c0_i32_0 = arith.constant 0 : i32
    %c0_i32_1 = arith.constant 0 : i32
    %c0_i32_2 = arith.constant 0 : i32
    return %c0_i32, %c0_i32_0, %c0_i32_1 : i32, i32, i32
  }
  func.func @transform_4(%arg0: i32) -> (i32, i32, i32, i32) {
    %c0_i32 = arith.constant 0 : i32
    %c0_i32_0 = arith.constant 0 : i32
    %c0_i32_1 = arith.constant 0 : i32
    %c0_i32_2 = arith.constant 0 : i32
    %c0_i32_3 = arith.constant 0 : i32
    return %c0_i32, %c0_i32_0, %c0_i32_1, %c0_i32_2 : i32, i32, i32, i32
  }
  func.func @transform_5(%arg0: i32) -> (i32, i32, i32, i32) {
    %c0_i32 = arith.constant 0 : i32
    %c0_i32_0 = arith.constant 0 : i32
    %c0_i32_1 = arith.constant 0 : i32
    %c0_i32_2 = arith.constant 0 : i32
    %c0_i32_3 = arith.constant 0 : i32
    return %c0_i32, %c0_i32_0, %c0_i32_1, %c0_i32_2 : i32, i32, i32, i32
  }
}

</mosaic_0001>

<llo_original>
// kernel: tpu_custom_call.1
$region0: #{tpu_custom_call.1}
  #allocation0 [shape = 'u32[]', space=smem, size = 0x4, offset = 0x4, fixed_abs, tag = 'smem constant byte address 0x4 - core index']
  #allocation1 [shape = 'u32[72,128]{1,0:T(1,128)}', space=vmem, size = 0x9000, scoped, tag = 'internal scratch']
  %s0 = inlined_call_operand.hbm [shape: f32[8,128], index: 0, kind: input, shape index: {}]
  %s1 = inlined_call_operand.hbm [shape: f32[8,128], index: 1, kind: output, shape index: {}]
  %s2 = sld [smem:[#allocation0]]
  $region18: #{tpu_custom_call.1} parent=0
    _
  %s4 = ssub.s32 1, %s2
  %s5 = scalar_select 0, %s4, %s2
  $region1: #{tpu_custom_call.1} parent=0
    #allocation2 [shape = 'u8[4096]{0}', space=vmem, size = 0x1000, scoped, tag = 'input window, operand 0, single buffered']
    #allocation3 [shape = 's32[1]{0}', space=sflag, size = 0x4, scoped, tag = 'scoped memory for tpu_custom_call.1']
    #allocation4 [shape = 's32[1]{0}', space=sflag, size = 0x4, scoped, tag = 'scoped memory for tpu_custom_call.1']
    #allocation5 [shape = 'u8[4096]{0}', space=vmem, size = 0x1000, scoped, tag = 'output window, operand 0, single buffered']
    %6 = vsyncpa [#allocation3], 0
    %7 = vsyncpa [#allocation4], 0
    // Predicated region
    $region2: #{tpu_custom_call.1} parent=1 // pred_check
      _
    $region3: #{tpu_custom_call.1} parent=1 // pred_check_branch
      %9 = sbr.rel (0) target = $region5
    $region4: #{tpu_custom_call.1} parent=1 // pred_region
      %11 = vsyncadd [#allocation3], 0
      %s13 = sshll.u32 %s0, 4
      %s14 = int_to_ptr.hbm [resolvable:$true] %s13
      %s15 = sshll.u32 [#allocation2], 4
      %s16 = int_to_ptr.vmem [resolvable:$true] %s15
      %18 = dma.hbm_to_vmem [thread:$0]  %s14, 128, %s16, [#allocation3]
    $region5: #{tpu_custom_call.1} parent=1 // pred_fallthru
      _
    // Predicated region
    $region6: #{tpu_custom_call.1} parent=1 // pred_check
      _
    $region7: #{tpu_custom_call.1} parent=1 // pred_check_branch
      %20 = sbr.rel (0) target = $region9
    $region8: #{tpu_custom_call.1} parent=1 // pred_region
      %22 = dma.done [#allocation3], 128
    $region9: #{tpu_custom_call.1} parent=1 // pred_fallthru
      _
    %v23 = vld [vmem:[#allocation2] sm:$0xff]
    %24 = vrot.lane.b32.xlu0 %v23, 64
    %v25 = vpop.permute.xlu0 %24
    %26 = vst [vmem:[#allocation5] sm:$0xff] %v25
    // Predicated region
    $region10: #{tpu_custom_call.1} parent=1 // pred_check
      _
    $region11: #{tpu_custom_call.1} parent=1 // pred_check_branch
      %28 = sbr.rel (0) target = $region13
    $region12: #{tpu_custom_call.1} parent=1 // pred_region
      %30 = vsyncadd [#allocation4], 0
      %s32 = sshll.u32 [#allocation5], 4
      %s33 = int_to_ptr.vmem [resolvable:$true] %s32
      %s34 = sshll.u32 %s1, 4
      %s35 = int_to_ptr.hbm [resolvable:$true] %s34
      %37 = dma.vmem_to_hbm [thread:$0]  %s33, 128, %s35, [#allocation4]
    $region13: #{tpu_custom_call.1} parent=1 // pred_fallthru
      _
    // Predicated region
    $region14: #{tpu_custom_call.1} parent=1 // pred_check
      _
    $region15: #{tpu_custom_call.1} parent=1 // pred_check_branch
      %39 = sbr.rel (0) target = $region17
    $region16: #{tpu_custom_call.1} parent=1 // pred_region
      %41 = dma.done [#allocation4], 128
    $region17: #{tpu_custom_call.1} parent=1 // pred_fallthru
      _
    %42 = vsyncpa [#allocation3], 1
    %43 = vsyncpa [#allocation4], 1

// kernel: tpu_custom_call.1
$region0: #{tpu_custom_call.1}
  #allocation0 [shape = 'u32[]', space=smem, size = 0x4, offset = 0x4, fixed_abs, tag = 'smem constant byte address 0x4 - core index']
  #allocation1 [shape = 'u32[72,128]{1,0:T(1,128)}', space=vmem, size = 0x9000, scoped, tag = 'internal scratch']
  %s0 = inlined_call_operand.hbm [shape: f32[2,4,16,128], index: 0, kind: input, shape index: {}]
  %s1 = inlined_call_operand.hbm [shape: f32[2,4,16,128], index: 1, kind: input, shape index: {}]
  %s2 = inlined_call_operand.hbm [shape: f32[1,16,128], index: 2, kind: input, shape index: {}]
  %s3 = inlined_call_operand.hbm [shape: f32[1,16,128], index: 3, kind: input, shape index: {}]
  %s4 = inlined_call_operand.hbm [shape: f32[2,4,16,128], index: 4, kind: output, shape index: {0}]
  %s5 = inlined_call_operand.hbm [shape: f32[2,4,16,128], index: 5, kind: output, shape index: {1}]
  %6 = xla_tuple %s4, %s5
  %s7 = sld [smem:[#allocation0]]
  $region50: #{tpu_custom_call.1} parent=0
    _
  %s9 = ssub.s32 1, %s7
  %s10 = scalar_select 0, %s9, %s7
  $region1: #{tpu_custom_call.1} parent=0
    #allocation2 [shape = 'u8[65536]{0}', space=vmem, size = 0x10000, scoped, tag = 'input window, operand 0, single buffered']
    #allocation3 [shape = 's32[1]{0}', space=sflag, size = 0x4, scoped, tag = 'scoped memory for tpu_custom_call.1']
    #allocation4 [shape = 's32[1]{0}', space=sflag, size = 0x4, scoped, tag = 'scoped memory for tpu_custom_call.1']
    #allocation5 [shape = 'u8[65536]{0}', space=vmem, size = 0x10000, scoped, tag = 'input window, operand 1, single buffered']
    #allocation6 [shape = 's32[1]{0}', space=sflag, size = 0x4, scoped, tag = 'scoped memory for tpu_custom_call.1']
    #allocation7 [shape = 'u8[8192]{0}', space=vmem, size = 0x2000, scoped, tag = 'input window, operand 2, single buffered']
    #allocation8 [shape = 'u8[8192]{0}', space=vmem, size = 0x2000, scoped, tag = 'input window, operand 3, single buffered']
    #allocation9 [shape = 's32[1]{0}', space=sflag, size = 0x4, scoped, tag = 'scoped memory for tpu_custom_call.1']
    #allocation10 [shape = 'u8[65536]{0}', space=vmem, size = 0x10000, scoped, tag = 'output window, operand 0, single buffered']
    #allocation11 [shape = 'u8[65536]{0}', space=vmem, size = 0x10000, scoped, tag = 'output window, operand 1, single buffered']
    #allocation12 [shape = 's32[1]{0}', space=sflag, size = 0x4, scoped, tag = 'scoped memory for tpu_custom_call.1']
    %11 = vsyncpa [#allocation3], 0
    %12 = vsyncpa [#allocation6], 0
    %13 = vsyncpa [#allocation9], 0
    %14 = vsyncpa [#allocation4], 0
    %15 = vsyncpa [#allocation12], 0
    // Predicated region
    $region2: #{tpu_custom_call.1} parent=1 // pred_check
      _
    $region3: #{tpu_custom_call.1} parent=1 // pred_check_branch
      %17 = sbr.rel (0) target = $region5
    $region4: #{tpu_custom_call.1} parent=1 // pred_region
      %19 = vsyncadd [#allocation3], 0
      %s20 = sshll.u32 %s0, 4
      %s21 = int_to_ptr.hbm [resolvable:$true] %s20
      %s22 = sshll.u32 [#allocation2], 4
      %s23 = int_to_ptr.vmem [resolvable:$true] %s22
      %28 = dma.hbm_to_vmem [thread:$0]  %s21, 2048, %s23, [#allocation3], 128, 128, 8
    $region5: #{tpu_custom_call.1} parent=1 // pred_fallthru
      _
    // Predicated region
    $region6: #{tpu_custom_call.1} parent=1 // pred_check
      _
    $region7: #{tpu_custom_call.1} parent=1 // pred_check_branch
      %30 = sbr.rel (0) target = $region9
    $region8: #{tpu_custom_call.1} parent=1 // pred_region
      %32 = vsyncadd [#allocation6], 0
      %s33 = sshll.u32 %s1, 4
      %s34 = int_to_ptr.hbm [resolvable:$true] %s33
      %s35 = sshll.u32 [#allocation5], 4
      %s36 = int_to_ptr.vmem [resolvable:$true] %s35
      %41 = dma.hbm_to_vmem [thread:$0]  %s34, 2048, %s36, [#allocation6], 128, 128, 8
    $region9: #{tpu_custom_call.1} parent=1 // pred_fallthru
      _
    // Predicated region
    $region10: #{tpu_custom_call.1} parent=1 // pred_check
      _
    $region11: #{tpu_custom_call.1} parent=1 // pred_check_branch
      %43 = sbr.rel (0) target = $region13
    $region12: #{tpu_custom_call.1} parent=1 // pred_region
      %45 = vsyncadd [#allocation6], 0
      %s46 = sshll.u32 %s2, 4
      %s47 = int_to_ptr.hbm [resolvable:$true] %s46
      %s48 = sshll.u32 [#allocation7], 4
      %s49 = int_to_ptr.vmem [resolvable:$true] %s48
      %54 = dma.hbm_to_vmem [thread:$0]  %s47, 256, %s49, [#allocation6], 128, 128, 8
    $region13: #{tpu_custom_call.1} parent=1 // pred_fallthru
      _
    // Predicated region
    $region14: #{tpu_custom_call.1} parent=1 // pred_check
      _
    $region15: #{tpu_custom_call.1} parent=1 // pred_check_branch
      %56 = sbr.rel (0) target = $region17
    $region16: #{tpu_custom_call.1} parent=1 // pred_region
      %58 = vsyncadd [#allocation9], 0
      %s59 = sshll.u32 %s3, 4
      %s60 = int_to_ptr.hbm [resolvable:$true] %s59
      %s61 = sshll.u32 [#allocation8], 4
      %s62 = int_to_ptr.vmem [resolvable:$true] %s61
      %67 = dma.hbm_to_vmem [thread:$0]  %s60, 256, %s62, [#allocation9], 128, 128, 8
    $region17: #{tpu_custom_call.1} parent=1 // pred_fallthru
      _
    // Predicated region
    $region18: #{tpu_custom_call.1} parent=1 // pred_check
      _
    $region19: #{tpu_custom_call.1} parent=1 // pred_check_branch
      %69 = sbr.rel (0) target = $region21
    $region20: #{tpu_custom_call.1} parent=1 // pred_region
      %71 = dma.done [#allocation3], 2048
    $region21: #{tpu_custom_call.1} parent=1 // pred_fallthru
      _
    // Predicated region
    $region22: #{tpu_custom_call.1} parent=1 // pred_check
      _
    $region23: #{tpu_custom_call.1} parent=1 // pred_check_branch
      %73 = sbr.rel (0) target = $region25
    $region24: #{tpu_custom_call.1} parent=1 // pred_region
      %75 = dma.done [#allocation6], 2048
    $region25: #{tpu_custom_call.1} parent=1 // pred_fallthru
      _
    // Predicated region
    $region26: #{tpu_custom_call.1} parent=1 // pred_check
      _
    $region27: #{tpu_custom_call.1} parent=1 // pred_check_branch
      %77 = sbr.rel (0) target = $region29
    $region28: #{tpu_custom_call.1} parent=1 // pred_region
      %79 = dma.done [#allocation6], 256
    $region29: #{tpu_custom_call.1} parent=1 // pred_fallthru
      _
    // Predicated region
    $region30: #{tpu_custom_call.1} parent=1 // pred_check
      _
    $region31: #{tpu_custom_call.1} parent=1 // pred_check_branch
      %81 = sbr.rel (0) target = $region33
    $region32: #{tpu_custom_call.1} parent=1 // pred_region
      %83 = dma.done [#allocation9], 256
    $region33: #{tpu_custom_call.1} parent=1 // pred_fallthru
      _
    %v84 = vld [vmem:[#allocation7] sm:$0xff]
    %v85 = vld [vmem:[#allocation7 + $0x8] sm:$0xff]
    %v86 = vld [vmem:[#allocation8] sm:$0xff]
    %v87 = vld [vmem:[#allocation8 + $0x8] sm:$0xff]
    %v88 = vld [vmem:[#allocation2] sm:$0xff]
    %v89 = vld [vmem:[#allocation2 + $0x8] sm:$0xff]
    %v90 = vld [vmem:[#allocation2 + $0x10] sm:$0xff]
    %v91 = vld [vmem:[#allocation2 + $0x18] sm:$0xff]
    %v92 = vld [vmem:[#allocation2 + $0x20] sm:$0xff]
    %v93 = vld [vmem:[#allocation2 + $0x28] sm:$0xff]
    %v94 = vld [vmem:[#allocation2 + $0x30] sm:$0xff]
    %v95 = vld [vmem:[#allocation2 + $0x38] sm:$0xff]
    %v96 = vld [vmem:[#allocation2 + $0x40] sm:$0xff]
    %v97 = vld [vmem:[#allocation2 + $0x48] sm:$0xff]
    %v98 = vld [vmem:[#allocation2 + $0x50] sm:$0xff]
    %v99 = vld [vmem:[#allocation2 + $0x58] sm:$0xff]
    %v100 = vld [vmem:[#allocation2 + $0x60] sm:$0xff]
    %v101 = vld [vmem:[#allocation2 + $0x68] sm:$0xff]
    %v102 = vld [vmem:[#allocation2 + $0x70] sm:$0xff]
    %v103 = vld [vmem:[#allocation2 + $0x78] sm:$0xff]
    %120 = vrot.lane.b32.xlu0 %v88, 64
    %v121 = vpop.permute.xlu0 %120
    %122 = vrot.lane.b32.xlu0 %v89, 64
    %v123 = vpop.permute.xlu0 %122
    %124 = vrot.lane.b32.xlu0 %v90, 64
    %v125 = vpop.permute.xlu0 %124
    %126 = vrot.lane.b32.xlu0 %v91, 64
    %v127 = vpop.permute.xlu0 %126
    %128 = vrot.lane.b32.xlu0 %v92, 64
    %v129 = vpop.permute.xlu0 %128
    %130 = vrot.lane.b32.xlu0 %v93, 64
    %v131 = vpop.permute.xlu0 %130
    %132 = vrot.lane.b32.xlu0 %v94, 64
    %v133 = vpop.permute.xlu0 %132
    %134 = vrot.lane.b32.xlu0 %v95, 64
    %v135 = vpop.permute.xlu0 %134
    %136 = vrot.lane.b32.xlu0 %v96, 64
    %v137 = vpop.permute.xlu0 %136
    %138 = vrot.lane.b32.xlu0 %v97, 64
    %v139 = vpop.permute.xlu0 %138
    %140 = vrot.lane.b32.xlu0 %v98, 64
    %v141 = vpop.permute.xlu0 %140
    %142 = vrot.lane.b32.xlu0 %v99, 64
    %v143 = vpop.permute.xlu0 %142
    %144 = vrot.lane.b32.xlu0 %v100, 64
    %v145 = vpop.permute.xlu0 %144
    %146 = vrot.lane.b32.xlu0 %v101, 64
    %v147 = vpop.permute.xlu0 %146
    %148 = vrot.lane.b32.xlu0 %v102, 64
    %v149 = vpop.permute.xlu0 %148
    %150 = vrot.lane.b32.xlu0 %v103, 64
    %v151 = vpop.permute.xlu0 %150
    %v168 = vmul.f32 %v88, %v84
    %v169 = vmul.f32 %v89, %v85
    %v170 = vmul.f32 %v90, %v84
    %v171 = vmul.f32 %v91, %v85
    %v172 = vmul.f32 %v92, %v84
    %v173 = vmul.f32 %v93, %v85
    %v174 = vmul.f32 %v94, %v84
    %v175 = vmul.f32 %v95, %v85
    %v176 = vmul.f32 %v96, %v84
    %v177 = vmul.f32 %v97, %v85
    %v178 = vmul.f32 %v98, %v84
    %v179 = vmul.f32 %v99, %v85
    %v180 = vmul.f32 %v100, %v84
    %v181 = vmul.f32 %v101, %v85
    %v182 = vmul.f32 %v102, %v84
    %v183 = vmul.f32 %v103, %v85
    %v184 = vmul.f32 %v121, %v86
    %v185 = vmul.f32 %v123, %v87
    %v186 = vmul.f32 %v125, %v86
    %v187 = vmul.f32 %v127, %v87
    %v188 = vmul.f32 %v129, %v86
    %v189 = vmul.f32 %v131, %v87
    %v190 = vmul.f32 %v133, %v86
    %v191 = vmul.f32 %v135, %v87
    %v192 = vmul.f32 %v137, %v86
    %v193 = vmul.f32 %v139, %v87
    %v194 = vmul.f32 %v141, %v86
    %v195 = vmul.f32 %v143, %v87
    %v196 = vmul.f32 %v145, %v86
    %v197 = vmul.f32 %v147, %v87
    %v198 = vmul.f32 %v149, %v86
    %v199 = vmul.f32 %v151, %v87
    %v200 = vadd.f32 %v168, %v184
    %v201 = vadd.f32 %v169, %v185
    %v202 = vadd.f32 %v170, %v186
    %v203 = vadd.f32 %v171, %v187
    %v204 = vadd.f32 %v172, %v188
    %v205 = vadd.f32 %v173, %v189
    %v206 = vadd.f32 %v174, %v190
    %v207 = vadd.f32 %v175, %v191
    %v208 = vadd.f32 %v176, %v192
    %v209 = vadd.f32 %v177, %v193
    %v210 = vadd.f32 %v178, %v194
    %v211 = vadd.f32 %v179, %v195
    %v212 = vadd.f32 %v180, %v196
    %v213 = vadd.f32 %v181, %v197
    %v214 = vadd.f32 %v182, %v198
    %v215 = vadd.f32 %v183, %v199
    %216 = vst [vmem:[#allocation10] sm:$0xff] %v200
    %217 = vst [vmem:[#allocation10 + $0x8] sm:$0xff] %v201
    %218 = vst [vmem:[#allocation10 + $0x10] sm:$0xff] %v202
    %219 = vst [vmem:[#allocation10 + $0x18] sm:$0xff] %v203
    %220 = vst [vmem:[#allocation10 + $0x20] sm:$0xff] %v204
    %221 = vst [vmem:[#allocation10 + $0x28] sm:$0xff] %v205
    %222 = vst [vmem:[#allocation10 + $0x30] sm:$0xff] %v206
    %223 = vst [vmem:[#allocation10 + $0x38] sm:$0xff] %v207
    %224 = vst [vmem:[#allocation10 + $0x40] sm:$0xff] %v208
    %225 = vst [vmem:[#allocation10 + $0x48] sm:$0xff] %v209
    %226 = vst [vmem:[#allocation10 + $0x50] sm:$0xff] %v210
    %227 = vst [vmem:[#allocation10 + $0x58] sm:$0xff] %v211
    %228 = vst [vmem:[#allocation10 + $0x60] sm:$0xff] %v212
    %229 = vst [vmem:[#allocation10 + $0x68] sm:$0xff] %v213
    %230 = vst [vmem:[#allocation10 + $0x70] sm:$0xff] %v214
    %231 = vst [vmem:[#allocation10 + $0x78] sm:$0xff] %v215
    %v232 = vld [vmem:[#allocation5] sm:$0xff]
    %v233 = vld [vmem:[#allocation5 + $0x8] sm:$0xff]
    %v234 = vld [vmem:[#allocation5 + $0x10] sm:$0xff]
    %v235 = vld [vmem:[#allocation5 + $0x18] sm:$0xff]
    %v236 = vld [vmem:[#allocation5 + $0x20] sm:$0xff]
    %v237 = vld [vmem:[#allocation5 + $0x28] sm:$0xff]
    %v238 = vld [vmem:[#allocation5 + $0x30] sm:$0xff]
    %v239 = vld [vmem:[#allocation5 + $0x38] sm:$0xff]
    %v240 = vld [vmem:[#allocation5 + $0x40] sm:$0xff]
    %v241 = vld [vmem:[#allocation5 + $0x48] sm:$0xff]
    %v242 = vld [vmem:[#allocation5 + $0x50] sm:$0xff]
    %v243 = vld [vmem:[#allocation5 + $0x58] sm:$0xff]
    %v244 = vld [vmem:[#allocation5 + $0x60] sm:$0xff]
    %v245 = vld [vmem:[#allocation5 + $0x68] sm:$0xff]
    %v246 = vld [vmem:[#allocation5 + $0x70] sm:$0xff]
    %v247 = vld [vmem:[#allocation5 + $0x78] sm:$0xff]
    %264 = vrot.lane.b32.xlu0 %v232, 64
    %v265 = vpop.permute.xlu0 %264
    %266 = vrot.lane.b32.xlu0 %v233, 64
    %v267 = vpop.permute.xlu0 %266
    %268 = vrot.lane.b32.xlu0 %v234, 64
    %v269 = vpop.permute.xlu0 %268
    %270 = vrot.lane.b32.xlu0 %v235, 64
    %v271 = vpop.permute.xlu0 %270
    %272 = vrot.lane.b32.xlu0 %v236, 64
    %v273 = vpop.permute.xlu0 %272
    %274 = vrot.lane.b32.xlu0 %v237, 64
    %v275 = vpop.permute.xlu0 %274
    %276 = vrot.lane.b32.xlu0 %v238, 64
    %v277 = vpop.permute.xlu0 %276
    %278 = vrot.lane.b32.xlu0 %v239, 64
    %v279 = vpop.permute.xlu0 %278
    %280 = vrot.lane.b32.xlu0 %v240, 64
    %v281 = vpop.permute.xlu0 %280
    %282 = vrot.lane.b32.xlu0 %v241, 64
    %v283 = vpop.permute.xlu0 %282
    %284 = vrot.lane.b32.xlu0 %v242, 64
    %v285 = vpop.permute.xlu0 %284
    %286 = vrot.lane.b32.xlu0 %v243, 64
    %v287 = vpop.permute.xlu0 %286
    %288 = vrot.lane.b32.xlu0 %v244, 64
    %v289 = vpop.permute.xlu0 %288
    %290 = vrot.lane.b32.xlu0 %v245, 64
    %v291 = vpop.permute.xlu0 %290
    %292 = vrot.lane.b32.xlu0 %v246, 64
    %v293 = vpop.permute.xlu0 %292
    %294 = vrot.lane.b32.xlu0 %v247, 64
    %v295 = vpop.permute.xlu0 %294
    %v312 = vmul.f32 %v232, %v84
    %v313 = vmul.f32 %v233, %v85
    %v314 = vmul.f32 %v234, %v84
    %v315 = vmul.f32 %v235, %v85
    %v316 = vmul.f32 %v236, %v84
    %v317 = vmul.f32 %v237, %v85
    %v318 = vmul.f32 %v238, %v84
    %v319 = vmul.f32 %v239, %v85
    %v320 = vmul.f32 %v240, %v84
    %v321 = vmul.f32 %v241, %v85
    %v322 = vmul.f32 %v242, %v84
    %v323 = vmul.f32 %v243, %v85
    %v324 = vmul.f32 %v244, %v84
    %v325 = vmul.f32 %v245, %v85
    %v326 = vmul.f32 %v246, %v84
    %v327 = vmul.f32 %v247, %v85
    %v328 = vmul.f32 %v265, %v86
    %v329 = vmul.f32 %v267, %v87
    %v330 = vmul.f32 %v269, %v86
    %v331 = vmul.f32 %v271, %v87
    %v332 = vmul.f32 %v273, %v86
    %v333 = vmul.f32 %v275, %v87
    %v334 = vmul.f32 %v277, %v86
    %v335 = vmul.f32 %v279, %v87
    %v336 = vmul.f32 %v281, %v86
    %v337 = vmul.f32 %v283, %v87
    %v338 = vmul.f32 %v285, %v86
    %v339 = vmul.f32 %v287, %v87
    %v340 = vmul.f32 %v289, %v86
    %v341 = vmul.f32 %v291, %v87
    %v342 = vmul.f32 %v293, %v86
    %v343 = vmul.f32 %v295, %v87
    %v344 = vadd.f32 %v312, %v328
    %v345 = vadd.f32 %v313, %v329
    %v346 = vadd.f32 %v314, %v330
    %v347 = vadd.f32 %v315, %v331
    %v348 = vadd.f32 %v316, %v332
    %v349 = vadd.f32 %v317, %v333
    %v350 = vadd.f32 %v318, %v334
    %v351 = vadd.f32 %v319, %v335
    %v352 = vadd.f32 %v320, %v336
    %v353 = vadd.f32 %v321, %v337
    %v354 = vadd.f32 %v322, %v338
    %v355 = vadd.f32 %v323, %v339
    %v356 = vadd.f32 %v324, %v340
    %v357 = vadd.f32 %v325, %v341
    %v358 = vadd.f32 %v326, %v342
    %v359 = vadd.f32 %v327, %v343
    %360 = vst [vmem:[#allocation11] sm:$0xff] %v344
    %361 = vst [vmem:[#allocation11 + $0x8] sm:$0xff] %v345
    %362 = vst [vmem:[#allocation11 + $0x10] sm:$0xff] %v346
    %363 = vst [vmem:[#allocation11 + $0x18] sm:$0xff] %v347
    %364 = vst [vmem:[#allocation11 + $0x20] sm:$0xff] %v348
    %365 = vst [vmem:[#allocation11 + $0x28] sm:$0xff] %v349
    %366 = vst [vmem:[#allocation11 + $0x30] sm:$0xff] %v350
    %367 = vst [vmem:[#allocation11 + $0x38] sm:$0xff] %v351
    %368 = vst [vmem:[#allocation11 + $0x40] sm:$0xff] %v352
    %369 = vst [vmem:[#allocation11 + $0x48] sm:$0xff] %v353
    %370 = vst [vmem:[#allocation11 + $0x50] sm:$0xff] %v354
    %371 = vst [vmem:[#allocation11 + $0x58] sm:$0xff] %v355
    %372 = vst [vmem:[#allocation11 + $0x60] sm:$0xff] %v356
    %373 = vst [vmem:[#allocation11 + $0x68] sm:$0xff] %v357
    %374 = vst [vmem:[#allocation11 + $0x70] sm:$0xff] %v358
    %375 = vst [vmem:[#allocation11 + $0x78] sm:$0xff] %v359
    // Predicated region
    $region34: #{tpu_custom_call.1} parent=1 // pred_check
      _
    $region35: #{tpu_custom_call.1} parent=1 // pred_check_branch
      %377 = sbr.rel (0) target = $region37
    $region36: #{tpu_custom_call.1} parent=1 // pred_region
      %379 = vsyncadd [#allocation4], 0
      %s380 = sshll.u32 [#allocation10], 4
      %s381 = int_to_ptr.vmem [resolvable:$true] %s380
      %s382 = sshll.u32 %s4, 4
      %s383 = int_to_ptr.hbm [resolvable:$true] %s382
      %388 = dma.vmem_to_hbm [thread:$0]  %s381, 2048, %s383, [#allocation4], 128, 128, 8
    $region37: #{tpu_custom_call.1} parent=1 // pred_fallthru
      _
    // Predicated region
    $region38: #{tpu_custom_call.1} parent=1 // pred_check
      _
    $region39: #{tpu_custom_call.1} parent=1 // pred_check_branch
      %390 = sbr.rel (0) target = $region41
    $region40: #{tpu_custom_call.1} parent=1 // pred_region
      %392 = vsyncadd [#allocation12], 0
      %s393 = sshll.u32 [#allocation11], 4
      %s394 = int_to_ptr.vmem [resolvable:$true] %s393
      %s395 = sshll.u32 %s5, 4
      %s396 = int_to_ptr.hbm [resolvable:$true] %s395
      %401 = dma.vmem_to_hbm [thread:$0]  %s394, 2048, %s396, [#allocation12], 128, 128, 8
    $region41: #{tpu_custom_call.1} parent=1 // pred_fallthru
      _
    // Predicated region
    $region42: #{tpu_custom_call.1} parent=1 // pred_check
      _
    $region43: #{tpu_custom_call.1} parent=1 // pred_check_branch
      %403 = sbr.rel (0) target = $region45
    $region44: #{tpu_custom_call.1} parent=1 // pred_region
      %405 = dma.done [#allocation4], 2048
    $region45: #{tpu_custom_call.1} parent=1 // pred_fallthru
      _
    // Predicated region
    $region46: #{tpu_custom_call.1} parent=1 // pred_check
      _
    $region47: #{tpu_custom_call.1} parent=1 // pred_check_branch
      %407 = sbr.rel (0) target = $region49
    $region48: #{tpu_custom_call.1} parent=1 // pred_region
      %409 = dma.done [#allocation12], 2048
    $region49: #{tpu_custom_call.1} parent=1 // pred_fallthru
      _
    %410 = vsyncpa [#allocation3], 1
    %411 = vsyncpa [#allocation6], 1
    %412 = vsyncpa [#allocation9], 1
    %413 = vsyncpa [#allocation4], 1
    %414 = vsyncpa [#allocation12], 1

</llo_original>
